<compile_context>
chip_gen: v7x
topology: tpu7x:2x2x1
jax: 0.10.0
libtpu: 0.0.40
codegen_flags: <defaults>
</compile_context>

<pallas_src>
import functools
import math

import jax
import jax.numpy as jnp
import numpy as np
from jax import lax
from jax.experimental import pallas as pl
from jax.experimental.pallas import tpu as pltpu


# TODO(synk): kernel is specialized to sizes=[input, H1, H2, 1] (two hidden
# layers); other depths of the generic `sizes` list need a regenerated kernel.
def mlp_reward_kernel(x_ref, starts_ref, ends_ref,
                      w1_ref, b1_ref, w2_ref, b2_ref, w3t_ref, b3_ref,
                      rew_ref, seg_ref, *, rew_lim, row_tile, n_seg):
    # ---- Layer 1: single K=16 matmul (concat folded in the wrapper).
    h = jnp.dot(x_ref[...], w1_ref[...],
                preferred_element_type=jnp.float32) + b1_ref[...]
    h = jnp.maximum(h, 0.0)                      # ReLU; Dropout = identity (eval)

    # ---- Layer 2: Linear -> ReLU -> Dropout(id)
    h = jnp.maximum(
        jnp.dot(h.astype(w2_ref.dtype), w2_ref[...],
                preferred_element_type=jnp.float32) + b2_ref[...], 0.0)

    # ---- Output layer, produced LANE-DENSE: (1,H2) x (TM,H2)^T -> (1,TM).
    y = jnp.tanh(
        lax.dot_general(w3t_ref[...], h.astype(w3t_ref.dtype),
                        dimension_numbers=(((1,), (1,)), ((), ())),
                        preferred_element_type=jnp.float32)
        + b3_ref[...])                                           # (1, TM)

    # reward_output = rew_lim * x  (full-width store; wrapper keeps sublane 0)
    rew_ref[0] = jnp.broadcast_to(rew_lim * y, (8, row_tile)).astype(rew_ref.dtype)

    # ---- Segment reduction on the UNSCALED output (matches the torch code).
    # Rebuild the (row_tile, S) one-hot mask in-register from [start, end).
    row0 = pl.program_id(0) * row_tile
    rows = row0 + lax.broadcasted_iota(jnp.int32, (row_tile, n_seg), 0)
    mask = ((rows >= starts_ref[...]) & (rows < ends_ref[...])).astype(jnp.float32)
    # Single MXU contraction over the row axis: (1,TM) x (TM,S) -> (1,S).
    partial = jnp.dot(y, mask, preferred_element_type=jnp.float32)
    seg_ref[0] = jnp.broadcast_to(partial, (8, n_seg)).astype(seg_ref.dtype)


def mlp_reward_forward(obs, act, obs2, seg_len, params, *, rew_lim=1.0,
                       normalize_seg_rew=False, row_tile=512,
                       compute_dtype=jnp.float32):
    """obs/act/obs2: (N, feat) rows = flattened segment samples; seg_len: (S,)."""
    N = obs.shape[0]
    S = int(seg_len.shape[0])

    # torch.cat((obs, act, obs2), dim=1): a 16-lane concat done once here so the
    # first layer is one K=16 MXU matmul instead of three sub-8-deep ones.
    x = jnp.concatenate([obs, act, obs2], axis=1).astype(compute_dtype)
    in_dim = x.shape[1]

    # Row tiling: multiple of 128, shrunk when N is small so padding stays
    # bounded.  (On v7x prefer an even tile count >= 4 so the "parallel" grid
    # axis actually shards across both TensorCores.)
    eff_tile = int(min(int(row_tile), max(128, -(-N // 128) * 128)))
    n_tiles = -(-N // eff_tile)
    N_pad = n_tiles * eff_tile
    x = jnp.pad(x, ((0, N_pad - N), (0, 0)))

    # Per-segment [start, end) row indices — replaces the dense (N, S) mask.
    # Padded rows (>= N) fall outside every [start, end), so they contribute 0.
    seg_len = seg_len.astype(jnp.int32)
    ends_v = jnp.cumsum(seg_len)
    starts = (ends_v - seg_len)[None, :]                       # (1, S)
    ends = ends_v[None, :]                                     # (1, S)

    w1 = params["w1"].astype(compute_dtype)                    # (in_dim, H1)
    b1 = params["b1"].astype(jnp.float32)                      # (1, H1)
    w2 = params["w2"].astype(compute_dtype)                    # (H1, H2)
    b2 = params["b2"].astype(jnp.float32)                      # (1, H2)
    w3t = params["w3"].reshape(1, -1).astype(compute_dtype)    # (1, H2)
    b3 = params["b3"].reshape(1, 1).astype(jnp.float32)        # (1, 1)
    small = (starts, ends, w1, b1, w2, b2, w3t, b3)

    def full_spec(a):
        nd = a.ndim
        return pl.BlockSpec(a.shape, lambda i, _nd=nd: (0,) * _nd)

    kernel = functools.partial(mlp_reward_kernel, rew_lim=float(rew_lim),
                               row_tile=eff_tile, n_seg=S)

    rew_tiles, seg_part = pl.pallas_call(
        kernel,
        grid=(n_tiles,),
        in_specs=[pl.BlockSpec((eff_tile, in_dim), lambda i: (i, 0))]
                 + [full_spec(a) for a in small],
        out_specs=(pl.BlockSpec((1, 8, eff_tile), lambda i: (i, 0, 0)),
                   pl.BlockSpec((1, 8, S), lambda i: (i, 0, 0))),
        out_shape=(jax.ShapeDtypeStruct((n_tiles, 8, eff_tile), jnp.float32),
                   jax.ShapeDtypeStruct((n_tiles, 8, S), jnp.float32)),
        compiler_params=pltpu.CompilerParams(
            dimension_semantics=("parallel",),
            vmem_limit_bytes=32 * 1024 * 1024),
    )(x, *small)

    reward_output = rew_tiles[:, 0, :].reshape(N_pad, 1)[:N]   # (N, 1), scaled
    seg_sums = seg_part[:, 0, :].sum(axis=0)                   # (S,), UNSCALED
    if normalize_seg_rew:
        # TODO(synk): no zero-length-segment guard, same as the torch reference.
        seg_sums = seg_sums / seg_len.astype(seg_sums.dtype)
    bs = S // 2
    seg_reward_output = jnp.stack([seg_sums[:bs], seg_sums[bs:]], axis=1)  # (bs, 2)
    return reward_output, seg_reward_output


def init_params(key, obs_dim, act_dim, hidden1=64, hidden2=64, output_size=1):
    """PyTorch nn.Linear default init U(-1/sqrt(fan_in), 1/sqrt(fan_in));
    weights stored pre-transposed to (in_features, out_features)."""
    in_dim = obs_dim + act_dim + obs_dim
    ks = jax.random.split(key, 6)

    def u(k, shape, fan_in):
        b = 1.0 / math.sqrt(fan_in)
        return jax.random.uniform(k, shape, jnp.float32, -b, b)

    return {
        "w1": u(ks[0], (in_dim, hidden1), in_dim),
        "b1": u(ks[1], (1, hidden1), in_dim),
        "w2": u(ks[2], (hidden1, hidden2), hidden1),
        "b2": u(ks[3], (1, hidden2), hidden1),
        "w3": u(ks[4], (hidden2, output_size), hidden2),
        "b3": u(ks[5], (1, output_size), hidden2),
    }


def mlp_reward_ref(obs, act, obs2, seg_len, params, *, rew_lim=1.0,
                   normalize_seg_rew=False):
    """Pure-JAX reference mirroring the PyTorch forward."""
    x = jnp.concatenate([obs, act, obs2], axis=1)
    h = jnp.maximum(x @ params["w1"] + params["b1"], 0.0)
    h = jnp.maximum(h @ params["w2"] + params["b2"], 0.0)
    y = jnp.tanh(h @ params["w3"] + params["b3"])
    reward = rew_lim * y
    ends = jnp.cumsum(seg_len)
    starts = ends - seg_len
    rows = jnp.arange(x.shape[0])[:, None]
    mask = ((rows >= starts[None, :]) & (rows < ends[None, :])).astype(y.dtype)
    seg = (y.T @ mask).reshape(-1)
    if normalize_seg_rew:
        seg = seg / seg_len.astype(seg.dtype)
    bs = seg_len.shape[0] // 2
    return reward, jnp.stack([seg[:bs], seg[bs:]], axis=1)


if __name__ == "__main__":
    key = jax.random.PRNGKey(0)
    obs_dim, act_dim = 6, 4
    hidden1, hidden2 = 64, 64                 # sizes = [16, 64, 64, 1]
    seg_len = jnp.array([8, 6, 8, 5], dtype=jnp.int32)   # 2*batch_size = 4 segments
    N = int(seg_len.sum())                    # total flattened samples = 27

    kp, ko, ka, ko2 = jax.random.split(key, 4)
    params = init_params(kp, obs_dim, act_dim, hidden1, hidden2)
    obs = jax.random.normal(ko, (N, obs_dim), jnp.float32)
    act = jax.random.normal(ka, (N, act_dim), jnp.float32)
    obs2 = jax.random.normal(ko2, (N, obs_dim), jnp.float32)

    reward, seg_reward = mlp_reward_forward(
        obs, act, obs2, seg_len, params, rew_lim=1.0, normalize_seg_rew=False)
    jax.block_until_ready((reward, seg_reward))

    ref_reward, ref_seg = mlp_reward_ref(
        obs, act, obs2, seg_len, params, rew_lim=1.0, normalize_seg_rew=False)

    assert reward.shape == (N, 1)
    assert seg_reward.shape == (seg_len.shape[0] // 2, 2)
    np.testing.assert_allclose(np.asarray(reward), np.asarray(ref_reward),
                               rtol=2e-3, atol=2e-3)
    np.testing.assert_allclose(np.asarray(seg_reward), np.asarray(ref_seg),
                               rtol=2e-3, atol=2e-3)
    print("KERNEL_OK")
</pallas_src>

<mosaic_0001>
module attributes {stable_mosaic.version = 11 : i64} {
  func.func @mlp_reward_kernel(%arg0: i32, %arg1: memref<128x16xf32, #tpu.memory_space<vmem>>, %arg2: memref<1x4xi32, #tpu.memory_space<vmem>>, %arg3: memref<1x4xi32, #tpu.memory_space<vmem>>, %arg4: memref<16x64xf32, #tpu.memory_space<vmem>>, %arg5: memref<1x64xf32, #tpu.memory_space<vmem>>, %arg6: memref<64x64xf32, #tpu.memory_space<vmem>>, %arg7: memref<1x64xf32, #tpu.memory_space<vmem>>, %arg8: memref<1x64xf32, #tpu.memory_space<vmem>>, %arg9: memref<1x1xf32, #tpu.memory_space<vmem>>, %arg10: memref<1x8x128xf32, #tpu.memory_space<vmem>>, %arg11: memref<1x8x4xf32, #tpu.memory_space<vmem>>) attributes {dimension_semantics = [#tpu.dimension_semantics<parallel>], iteration_bounds = array<i64: 1>, scalar_prefetch = 0 : i64, scratch_operands = 0 : i64, tpu.core_type = #tpu.core_type<tc>, window_params = [{transform_indices = @transform_0, window_bounds = array<i64: 128, 16>}, {pipeline_mode = #tpu.pipeline_mode<synchronous>, transform_indices = @transform_1, window_bounds = array<i64: 1, 4>}, {pipeline_mode = #tpu.pipeline_mode<synchronous>, transform_indices = @transform_2, window_bounds = array<i64: 1, 4>}, {pipeline_mode = #tpu.pipeline_mode<synchronous>, transform_indices = @transform_3, window_bounds = array<i64: 16, 64>}, {pipeline_mode = #tpu.pipeline_mode<synchronous>, transform_indices = @transform_4, window_bounds = array<i64: 1, 64>}, {pipeline_mode = #tpu.pipeline_mode<synchronous>, transform_indices = @transform_5, window_bounds = array<i64: 64, 64>}, {pipeline_mode = #tpu.pipeline_mode<synchronous>, transform_indices = @transform_6, window_bounds = array<i64: 1, 64>}, {pipeline_mode = #tpu.pipeline_mode<synchronous>, transform_indices = @transform_7, window_bounds = array<i64: 1, 64>}, {pipeline_mode = #tpu.pipeline_mode<synchronous>, transform_indices = @transform_8, window_bounds = array<i64: 1, 1>}, {transform_indices = @transform_9, window_bounds = array<i64: 1, 8, 128>}, {transform_indices = @transform_10, window_bounds = array<i64: 1, 8, 4>}]} {
    %c0 = arith.constant 0 : index
    %c0_0 = arith.constant 0 : index
    %0 = vector.load %arg1[%c0, %c0_0] : memref<128x16xf32, #tpu.memory_space<vmem>>, vector<128x16xf32>
    %c0_1 = arith.constant 0 : index
    %c0_2 = arith.constant 0 : index
    %1 = vector.load %arg4[%c0_1, %c0_2] : memref<16x64xf32, #tpu.memory_space<vmem>>, vector<16x64xf32>
    %cst = arith.constant dense<0.000000e+00> : vector<128x64xf32>
    %2 = tpu.matmul %0, %1, %cst {dimension_numbers = #tpu.dot_dimension_numbers<[1], [0], [0], [1], [0, 0, 1, 1], [], []>} : vector<128x16xf32>, vector<16x64xf32>, vector<128x64xf32> -> vector<128x64xf32>
    %c0_3 = arith.constant 0 : index
    %c0_4 = arith.constant 0 : index
    %3 = vector.load %arg5[%c0_3, %c0_4] : memref<1x64xf32, #tpu.memory_space<vmem>>, vector<1x64xf32>
    %4 = vector.broadcast %3 : vector<1x64xf32> to vector<128x64xf32>
    %5 = arith.addf %2, %4 : vector<128x64xf32>
    %cst_5 = arith.constant 0.000000e+00 : f32
    %6 = vector.broadcast %cst_5 : f32 to vector<128x64xf32>
    %7 = arith.maximumf %5, %6 : vector<128x64xf32>
    %c0_6 = arith.constant 0 : index
    %c0_7 = arith.constant 0 : index
    %8 = vector.load %arg6[%c0_6, %c0_7] : memref<64x64xf32, #tpu.memory_space<vmem>>, vector<64x64xf32>
    %cst_8 = arith.constant dense<0.000000e+00> : vector<128x64xf32>
    %9 = tpu.matmul %7, %8, %cst_8 {dimension_numbers = #tpu.dot_dimension_numbers<[1], [0], [0], [1], [0, 0, 1, 1], [], []>} : vector<128x64xf32>, vector<64x64xf32>, vector<128x64xf32> -> vector<128x64xf32>
    %c0_9 = arith.constant 0 : index
    %c0_10 = arith.constant 0 : index
    %10 = vector.load %arg7[%c0_9, %c0_10] : memref<1x64xf32, #tpu.memory_space<vmem>>, vector<1x64xf32>
    %11 = vector.broadcast %10 : vector<1x64xf32> to vector<128x64xf32>
    %12 = arith.addf %9, %11 : vector<128x64xf32>
    %cst_11 = arith.constant 0.000000e+00 : f32
    %13 = vector.broadcast %cst_11 : f32 to vector<128x64xf32>
    %14 = arith.maximumf %12, %13 : vector<128x64xf32>
    %c0_12 = arith.constant 0 : index
    %c0_13 = arith.constant 0 : index
    %15 = vector.load %arg8[%c0_12, %c0_13] : memref<1x64xf32, #tpu.memory_space<vmem>>, vector<1x64xf32>
    %cst_14 = arith.constant dense<0.000000e+00> : vector<1x128xf32>
    %16 = tpu.matmul %15, %14, %cst_14 {dimension_numbers = #tpu.dot_dimension_numbers<[1], [1], [0], [0], [0, 0, 1, 0], [], []>} : vector<1x64xf32>, vector<128x64xf32>, vector<1x128xf32> -> vector<1x128xf32>
    %c0_15 = arith.constant 0 : index
    %c0_16 = arith.constant 0 : index
    %17 = vector.load %arg9[%c0_15, %c0_16] : memref<1x1xf32, #tpu.memory_space<vmem>>, vector<1x1xf32>
    %18 = vector.broadcast %17 : vector<1x1xf32> to vector<1x128xf32>
    %19 = arith.addf %16, %18 : vector<1x128xf32>
    %20 = math.tanh %19 : vector<1x128xf32>
    %cst_17 = arith.constant 1.000000e+00 : f32
    %21 = vector.broadcast %cst_17 : f32 to vector<1x128xf32>
    %22 = arith.mulf %21, %20 : vector<1x128xf32>
    %23 = vector.shape_cast %22 : vector<1x128xf32> to vector<1x128xf32>
    %24 = vector.broadcast %23 : vector<1x128xf32> to vector<8x128xf32>
    %c0_18 = arith.constant 0 : index
    %c0_19 = arith.constant 0 : index
    %c0_20 = arith.constant 0 : index
    %25 = vector.load %arg10[%c0_18, %c0_19, %c0_20] : memref<1x8x128xf32, #tpu.memory_space<vmem>>, vector<1x8x128xf32>
    %26 = vector.shape_cast %25 : vector<1x8x128xf32> to vector<8x128xf32>
    %27 = vector.shape_cast %24 : vector<8x128xf32> to vector<1x8x128xf32>
    tpu.vector_store %arg10[%c0_18, %c0_19, %c0_20], %27 {strides = array<i32>} : memref<1x8x128xf32, #tpu.memory_space<vmem>>, vector<1x8x128xf32>,
    %c128_i32 = arith.constant 128 : i32
    %28 = arith.muli %arg0, %c128_i32 : i32
    %29 = tpu.iota {dimensions = array<i32: 0>} : vector<128x4xi32>
    %30 = vector.broadcast %28 : i32 to vector<128x4xi32>
    %31 = arith.addi %30, %29 : vector<128x4xi32>
    %c0_21 = arith.constant 0 : index
    %c0_22 = arith.constant 0 : index
    %32 = vector.load %arg2[%c0_21, %c0_22] : memref<1x4xi32, #tpu.memory_space<vmem>>, vector<1x4xi32>
    %33 = vector.broadcast %32 : vector<1x4xi32> to vector<128x4xi32>
    %34 = arith.cmpi sge, %31, %33 : vector<128x4xi32>
    %c0_23 = arith.constant 0 : index
    %c0_24 = arith.constant 0 : index
    %35 = vector.load %arg3[%c0_23, %c0_24] : memref<1x4xi32, #tpu.memory_space<vmem>>, vector<1x4xi32>
    %36 = vector.broadcast %35 : vector<1x4xi32> to vector<128x4xi32>
    %37 = arith.cmpi slt, %31, %36 : vector<128x4xi32>
    %38 = arith.andi %34, %37 : vector<128x4xi1>
    %39 = arith.extui %38 : vector<128x4xi1> to vector<128x4xi32>
    %40 = arith.sitofp %39 : vector<128x4xi32> to vector<128x4xf32>
    %cst_25 = arith.constant dense<0.000000e+00> : vector<1x4xf32>
    %41 = tpu.matmul %20, %40, %cst_25 {dimension_numbers = #tpu.dot_dimension_numbers<[1], [0], [0], [1], [0, 0, 1, 1], [], []>} : vector<1x128xf32>, vector<128x4xf32>, vector<1x4xf32> -> vector<1x4xf32>
    %42 = vector.shape_cast %41 : vector<1x4xf32> to vector<1x4xf32>
    %43 = vector.broadcast %42 : vector<1x4xf32> to vector<8x4xf32>
    %c0_26 = arith.constant 0 : index
    %c0_27 = arith.constant 0 : index
    %c0_28 = arith.constant 0 : index
    %44 = vector.load %arg11[%c0_26, %c0_27, %c0_28] : memref<1x8x4xf32, #tpu.memory_space<vmem>>, vector<1x8x4xf32>
    %45 = vector.shape_cast %44 : vector<1x8x4xf32> to vector<8x4xf32>
    %46 = vector.shape_cast %43 : vector<8x4xf32> to vector<1x8x4xf32>
    tpu.vector_store %arg11[%c0_26, %c0_27, %c0_28], %46 {strides = array<i32>} : memref<1x8x4xf32, #tpu.memory_space<vmem>>, vector<1x8x4xf32>,
    return
  }
  func.func @transform_0(%arg0: i32) -> (i32, i32) {
    %c0_i32 = arith.constant 0 : i32
    %c0_i32_0 = arith.constant 0 : i32
    return %arg0, %c0_i32 : i32, i32
  }
  func.func @transform_1(%arg0: i32) -> (i32, i32) {
    %c0_i32 = arith.constant 0 : i32
    %c0_i32_0 = arith.constant 0 : i32
    %c0_i32_1 = arith.constant 0 : i32
    return %c0_i32, %c0_i32_0 : i32, i32
  }
  func.func @transform_2(%arg0: i32) -> (i32, i32) {
    %c0_i32 = arith.constant 0 : i32
    %c0_i32_0 = arith.constant 0 : i32
    %c0_i32_1 = arith.constant 0 : i32
    return %c0_i32, %c0_i32_0 : i32, i32
  }
  func.func @transform_3(%arg0: i32) -> (i32, i32) {
    %c0_i32 = arith.constant 0 : i32
    %c0_i32_0 = arith.constant 0 : i32
    %c0_i32_1 = arith.constant 0 : i32
    return %c0_i32, %c0_i32_0 : i32, i32
  }
  func.func @transform_4(%arg0: i32) -> (i32, i32) {
    %c0_i32 = arith.constant 0 : i32
    %c0_i32_0 = arith.constant 0 : i32
    %c0_i32_1 = arith.constant 0 : i32
    return %c0_i32, %c0_i32_0 : i32, i32
  }
  func.func @transform_5(%arg0: i32) -> (i32, i32) {
    %c0_i32 = arith.constant 0 : i32
    %c0_i32_0 = arith.constant 0 : i32
    %c0_i32_1 = arith.constant 0 : i32
    return %c0_i32, %c0_i32_0 : i32, i32
  }
  func.func @transform_6(%arg0: i32) -> (i32, i32) {
    %c0_i32 = arith.constant 0 : i32
    %c0_i32_0 = arith.constant 0 : i32
    %c0_i32_1 = arith.constant 0 : i32
    return %c0_i32, %c0_i32_0 : i32, i32
  }
  func.func @transform_7(%arg0: i32) -> (i32, i32) {
    %c0_i32 = arith.constant 0 : i32
    %c0_i32_0 = arith.constant 0 : i32
    %c0_i32_1 = arith.constant 0 : i32
    return %c0_i32, %c0_i32_0 : i32, i32
  }
  func.func @transform_8(%arg0: i32) -> (i32, i32) {
    %c0_i32 = arith.constant 0 : i32
    %c0_i32_0 = arith.constant 0 : i32
    %c0_i32_1 = arith.constant 0 : i32
    return %c0_i32, %c0_i32_0 : i32, i32
  }
  func.func @transform_9(%arg0: i32) -> (i32, i32, i32) {
    %c0_i32 = arith.constant 0 : i32
    %c0_i32_0 = arith.constant 0 : i32
    %c0_i32_1 = arith.constant 0 : i32
    return %arg0, %c0_i32, %c0_i32_0 : i32, i32, i32
  }
  func.func @transform_10(%arg0: i32) -> (i32, i32, i32) {
    %c0_i32 = arith.constant 0 : i32
    %c0_i32_0 = arith.constant 0 : i32
    %c0_i32_1 = arith.constant 0 : i32
    return %arg0, %c0_i32, %c0_i32_0 : i32, i32, i32
  }
}

</mosaic_0001>

<llo_original>
// kernel: tpu_custom_call.1
$region0: #{tpu_custom_call.1}
  #allocation0 [shape = 'u32[]', space=smem, size = 0x4, offset = 0x4, fixed_abs, tag = 'smem constant byte address 0x4 - core index']
  #allocation1 [shape = 'u32[144,128]{1,0:T(1,128)}', space=vmem, size = 0x12000, scoped, tag = 'internal scratch']
  #allocation2 [shape = 'f32[1,1]{1,0:T(1,128)S(1)}', space=vmem, size = 0x200, scoped, tag = 'scoped memory for tpu_custom_call.1']
  %s0 = inlined_call_operand.vmem [shape: f32[128,16], index: 0, kind: input, shape index: {}]
  %s1 = inlined_call_operand.vmem [shape: s32[1,4], index: 1, kind: input, shape index: {}]
  %s2 = inlined_call_operand.vmem [shape: s32[1,4], index: 2, kind: input, shape index: {}]
  %s3 = inlined_call_operand.vmem [shape: f32[16,64], index: 3, kind: input, shape index: {}]
  %s4 = inlined_call_operand.vmem [shape: f32[1,64], index: 4, kind: input, shape index: {}]
  %s5 = inlined_call_operand.vmem [shape: f32[64,64], index: 5, kind: input, shape index: {}]
  %s6 = inlined_call_operand.vmem [shape: f32[1,64], index: 6, kind: input, shape index: {}]
  %s7 = inlined_call_operand.vmem [shape: f32[1,64], index: 7, kind: input, shape index: {}]
  %s8 = inlined_call_operand.<no memory space> [shape: f32[1,1], index: 8, kind: input, shape index: {}]
  %s9 = inlined_call_operand.hbm [shape: f32[1,8,128], index: 9, kind: output, shape index: {0}]
  %s10 = inlined_call_operand.vmem [shape: f32[1,8,4], index: 10, kind: output, shape index: {1}]
  %11 = xla_tuple %s9, %s10
  %s12 = sld [smem:[#allocation0]]
  $region54: #{tpu_custom_call.1} parent=0
    _
  %s14 = ssub.s32 1, %s12
  %s15 = scalar_select 0, %s14, %s12
  %v16 = vstv %s8
  %17 = vst [vmem:[#allocation2] sm:$0x1] %v16
  $region1: #{tpu_custom_call.1} parent=0
    #allocation3 [shape = 'u8[4096]{0}', space=vmem, size = 0x1000, scoped, tag = 'output window, operand 0, single buffered']
    #allocation4 [shape = 's32[1]{0}', space=sflag, size = 0x4, scoped, tag = 'scoped memory for tpu_custom_call.1']
    %18 = vsyncpa [#allocation4], 0
    // Predicated region
    $region2: #{tpu_custom_call.1} parent=1 // pred_check
      _
    $region3: #{tpu_custom_call.1} parent=1 // pred_check_branch
      %20 = sbr.rel (0) target = $region5
    $region4: #{tpu_custom_call.1} parent=1 // pred_region
      _
    $region5: #{tpu_custom_call.1} parent=1 // pred_fallthru
      _
    // Predicated region
    $region6: #{tpu_custom_call.1} parent=1 // pred_check
      _
    $region7: #{tpu_custom_call.1} parent=1 // pred_check_branch
      %22 = sbr.rel (0) target = $region9
    $region8: #{tpu_custom_call.1} parent=1 // pred_region
      _
    $region9: #{tpu_custom_call.1} parent=1 // pred_fallthru
      _
    // Predicated region
    $region10: #{tpu_custom_call.1} parent=1 // pred_check
      _
    $region11: #{tpu_custom_call.1} parent=1 // pred_check_branch
      %24 = sbr.rel (0) target = $region13
    $region12: #{tpu_custom_call.1} parent=1 // pred_region
      _
    $region13: #{tpu_custom_call.1} parent=1 // pred_fallthru
      _
    // Predicated region
    $region14: #{tpu_custom_call.1} parent=1 // pred_check
      _
    $region15: #{tpu_custom_call.1} parent=1 // pred_check_branch
      %26 = sbr.rel (0) target = $region17
    $region16: #{tpu_custom_call.1} parent=1 // pred_region
      _
    $region17: #{tpu_custom_call.1} parent=1 // pred_fallthru
      _
    // Predicated region
    $region18: #{tpu_custom_call.1} parent=1 // pred_check
      _
    $region19: #{tpu_custom_call.1} parent=1 // pred_check_branch
      %28 = sbr.rel (0) target = $region21
    $region20: #{tpu_custom_call.1} parent=1 // pred_region
      _
    $region21: #{tpu_custom_call.1} parent=1 // pred_fallthru
      _
    // Predicated region
    $region22: #{tpu_custom_call.1} parent=1 // pred_check
      _
    $region23: #{tpu_custom_call.1} parent=1 // pred_check_branch
      %30 = sbr.rel (0) target = $region25
    $region24: #{tpu_custom_call.1} parent=1 // pred_region
      _
    $region25: #{tpu_custom_call.1} parent=1 // pred_fallthru
      _
    // Predicated region
    $region26: #{tpu_custom_call.1} parent=1 // pred_check
      _
    $region27: #{tpu_custom_call.1} parent=1 // pred_check_branch
      %32 = sbr.rel (0) target = $region29
    $region28: #{tpu_custom_call.1} parent=1 // pred_region
      _
    $region29: #{tpu_custom_call.1} parent=1 // pred_fallthru
      _
    // Predicated region
    $region30: #{tpu_custom_call.1} parent=1 // pred_check
      _
    $region31: #{tpu_custom_call.1} parent=1 // pred_check_branch
      %34 = sbr.rel (0) target = $region33
    $region32: #{tpu_custom_call.1} parent=1 // pred_region
      _
    $region33: #{tpu_custom_call.1} parent=1 // pred_fallthru
      _
    // Predicated region
    $region34: #{tpu_custom_call.1} parent=1 // pred_check
      _
    $region35: #{tpu_custom_call.1} parent=1 // pred_check_branch
      %36 = sbr.rel (0) target = $region37
    $region36: #{tpu_custom_call.1} parent=1 // pred_region
      _
    $region37: #{tpu_custom_call.1} parent=1 // pred_fallthru
      _
    %v37 = vld [vmem:[%s0] sm:$0xff]
    %v38 = vld [vmem:[%s0 + $0x8] sm:$0xff]
    %v39 = vld [vmem:[%s0 + $0x10] sm:$0xff]
    %v40 = vld [vmem:[%s0 + $0x18] sm:$0xff]
    %v41 = vld [vmem:[%s0 + $0x20] sm:$0xff]
    %v42 = vld [vmem:[%s0 + $0x28] sm:$0xff]
    %v43 = vld [vmem:[%s0 + $0x30] sm:$0xff]
    %v44 = vld [vmem:[%s0 + $0x38] sm:$0xff]
    %v45 = vld [vmem:[%s0 + $0x40] sm:$0xff]
    %v46 = vld [vmem:[%s0 + $0x48] sm:$0xff]
    %v47 = vld [vmem:[%s0 + $0x50] sm:$0xff]
    %v48 = vld [vmem:[%s0 + $0x58] sm:$0xff]
    %v49 = vld [vmem:[%s0 + $0x60] sm:$0xff]
    %v50 = vld [vmem:[%s0 + $0x68] sm:$0xff]
    %v51 = vld [vmem:[%s0 + $0x70] sm:$0xff]
    %v52 = vld [vmem:[%s0 + $0x78] sm:$0xff]
    %v53 = vld [vmem:[%s3] sm:$0xff]
    %v54 = vld [vmem:[%s3 + $0x8] sm:$0xff]
    %v55 = vld [vmem:[%s4] sm:$0x1]
    %v57 = vlaneseq
    %v58 = vshrl.u32 %v57, 7
    %v59 = vsub.s32 0, %v58
    %v60 = vrot.slane %v55, %v59
    %vm62 = vcmask 130048
    %v64 = vsel %vm62, %v37, 0
    %v67 = vsel %vm62, %v38, 0
    %v70 = vsel %vm62, %v39, 0
    %v73 = vsel %vm62, %v40, 0
    %v76 = vsel %vm62, %v41, 0
    %v79 = vsel %vm62, %v42, 0
    %v82 = vsel %vm62, %v43, 0
    %v85 = vsel %vm62, %v44, 0
    %v88 = vsel %vm62, %v45, 0
    %v91 = vsel %vm62, %v46, 0
    %v94 = vsel %vm62, %v47, 0
    %v97 = vsel %vm62, %v48, 0
    %v100 = vsel %vm62, %v49, 0
    %v103 = vsel %vm62, %v50, 0
    %v106 = vsel %vm62, %v51, 0
    %v109 = vsel %vm62, %v52, 0
    %111 = vmatprep.subr.mxu0 0.0
    %112 = vmatpush1.msra.mxu0 %v53
    %113 = vmatprep.subr.mxu0 0.0
    %114 = vmatpush1.msra.mxu0 %v54
    %115 = vmatprep.subr.mxu0 0.0
    %116 = vmatpush1.msra.mxu0 0.0
    %117 = vmatprep.subr.mxu0 0.0
    %118 = vmatpush1.msra.mxu0 0.0
    %119 = vmatprep.subr.mxu0 0.0
    %120 = vmatpush1.msra.mxu0 0.0
    %121 = vmatprep.subr.mxu0 0.0
    %122 = vmatpush1.msra.mxu0 0.0
    %123 = vmatprep.subr.mxu0 0.0
    %124 = vmatpush1.msra.mxu0 0.0
    %125 = vmatprep.subr.mxu0 0.0
    %126 = vmatpush1.msra.mxu0 0.0
    %127 = vmatprep.subr.mxu0 0.0
    %128 = vmatpush1.msra.mxu0 0.0
    %129 = vmatprep.subr.mxu0 0.0
    %130 = vmatpush1.msra.mxu0 0.0
    %131 = vmatprep.subr.mxu0 0.0
    %132 = vmatpush1.msra.mxu0 0.0
    %133 = vmatprep.subr.mxu0 0.0
    %134 = vmatpush1.msra.mxu0 0.0
    %135 = vmatprep.subr.mxu0 0.0
    %136 = vmatpush1.msra.mxu0 0.0
    %137 = vmatprep.subr.mxu0 0.0
    %138 = vmatpush1.msra.mxu0 0.0
    %139 = vmatprep.subr.mxu0 0.0
    %140 = vmatpush1.msra.mxu0 0.0
    %141 = vmatprep.subr.mxu0 0.0
    %142 = vmatpush1.msra.mxu0 0.0
    %143 = vmatprep.subr.mxu0 0.0
    %144 = vmatpush1.msra.mxu0 0.0
    %145 = vmatprep.subr.mxu0 0.0
    %146 = vmatpush1.msra.mxu0 0.0
    %147 = vmatprep.subr.mxu0 0.0
    %148 = vmatpush1.msra.mxu0 0.0
    %149 = vmatprep.subr.mxu0 0.0
    %150 = vmatpush1.msra.mxu0 0.0
    %151 = vmatprep.subr.mxu0 0.0
    %152 = vmatpush1.msra.mxu0 0.0
    %153 = vmatprep.subr.mxu0 0.0
    %154 = vmatpush1.msra.mxu0 0.0
    %155 = vmatprep.subr.mxu0 0.0
    %156 = vmatpush1.msra.mxu0 0.0
    %157 = vmatprep.subr.mxu0 0.0
    %158 = vmatpush1.msra.mxu0 0.0
    %159 = vmatprep.subr.mxu0 0.0
    %160 = vmatpush1.msra.mxu0 0.0
    %161 = vmatprep.subr.mxu0 0.0
    %162 = vmatpush1.msra.mxu0 0.0
    %163 = vmatprep.subr.mxu0 0.0
    %164 = vmatpush1.msra.mxu0 0.0
    %165 = vmatprep.subr.mxu0 0.0
    %166 = vmatpush1.msra.mxu0 0.0
    %167 = vmatprep.subr.mxu0 0.0
    %168 = vmatpush1.msra.mxu0 0.0
    %169 = vmatprep.subr.mxu0 0.0
    %170 = vmatpush1.msra.mxu0 0.0
    %171 = vmatprep.subr.mxu0 0.0
    %172 = vmatpush1.msra.mxu0 0.0
    %173 = vmatprep.subr.mxu0 0.0
    %174 = vmatpush1.msra.mxu0 0.0
    %175 = vmatprep.mubr.f32.mxu0 0.0
    %176 = vmatmul.mubr.f32.gmra.mrb[0].mxu0 %v64
    %v177 = vpop.f32.mrb[0].mxu0
    %v178 = vadd.f32 %v60, %v177
    %v179 = vpop.f32.mrb[0].mxu0
    %180 = vmatprep.mubr.f32.mxu0 0.0
    %181 = vmatmul.mubr.f32.gmra.mrb[0].mxu0 %v67
    %v182 = vpop.f32.mrb[0].mxu0
    %v183 = vadd.f32 %v60, %v182
    %v184 = vpop.f32.mrb[0].mxu0
    %185 = vmatprep.mubr.f32.mxu0 0.0
    %186 = vmatmul.mubr.f32.gmra.mrb[0].mxu0 %v70
    %v187 = vpop.f32.mrb[0].mxu0
    %v188 = vadd.f32 %v60, %v187
    %v189 = vpop.f32.mrb[0].mxu0
    %190 = vmatprep.mubr.f32.mxu0 0.0
    %191 = vmatmul.mubr.f32.gmra.mrb[0].mxu0 %v73
    %v192 = vpop.f32.mrb[0].mxu0
    %v193 = vadd.f32 %v60, %v192
    %v194 = vpop.f32.mrb[0].mxu0
    %195 = vmatprep.mubr.f32.mxu0 0.0
    %196 = vmatmul.mubr.f32.gmra.mrb[0].mxu0 %v76
    %v197 = vpop.f32.mrb[0].mxu0
    %v198 = vadd.f32 %v60, %v197
    %v199 = vpop.f32.mrb[0].mxu0
    %200 = vmatprep.mubr.f32.mxu0 0.0
    %201 = vmatmul.mubr.f32.gmra.mrb[0].mxu0 %v79
    %v202 = vpop.f32.mrb[0].mxu0
    %v203 = vadd.f32 %v60, %v202
    %v204 = vpop.f32.mrb[0].mxu0
    %205 = vmatprep.mubr.f32.mxu0 0.0
    %206 = vmatmul.mubr.f32.gmra.mrb[0].mxu0 %v82
    %v207 = vpop.f32.mrb[0].mxu0
    %v208 = vadd.f32 %v60, %v207
    %v209 = vpop.f32.mrb[0].mxu0
    %210 = vmatprep.mubr.f32.mxu0 0.0
    %211 = vmatmul.mubr.f32.gmra.mrb[0].mxu0 %v85
    %v212 = vpop.f32.mrb[0].mxu0
    %v213 = vadd.f32 %v60, %v212
    %v214 = vpop.f32.mrb[0].mxu0
    %215 = vmatprep.mubr.f32.mxu0 0.0
    %216 = vmatmul.mubr.f32.gmra.mrb[0].mxu0 %v88
    %v217 = vpop.f32.mrb[0].mxu0
    %v218 = vadd.f32 %v60, %v217
    %v219 = vpop.f32.mrb[0].mxu0
    %220 = vmatprep.mubr.f32.mxu0 0.0
    %221 = vmatmul.mubr.f32.gmra.mrb[0].mxu0 %v91
    %v222 = vpop.f32.mrb[0].mxu0
    %v223 = vadd.f32 %v60, %v222
    %v224 = vpop.f32.mrb[0].mxu0
    %225 = vmatprep.mubr.f32.mxu0 0.0
    %226 = vmatmul.mubr.f32.gmra.mrb[0].mxu0 %v94
    %v227 = vpop.f32.mrb[0].mxu0
    %v228 = vadd.f32 %v60, %v227
    %v229 = vpop.f32.mrb[0].mxu0
    %230 = vmatprep.mubr.f32.mxu0 0.0
    %231 = vmatmul.mubr.f32.gmra.mrb[0].mxu0 %v97
    %v232 = vpop.f32.mrb[0].mxu0
    %v233 = vadd.f32 %v60, %v232
    %v234 = vpop.f32.mrb[0].mxu0
    %235 = vmatprep.mubr.f32.mxu0 0.0
    %236 = vmatmul.mubr.f32.gmra.mrb[0].mxu0 %v100
    %v237 = vpop.f32.mrb[0].mxu0
    %v238 = vadd.f32 %v60, %v237
    %v239 = vpop.f32.mrb[0].mxu0
    %240 = vmatprep.mubr.f32.mxu0 0.0
    %241 = vmatmul.mubr.f32.gmra.mrb[0].mxu0 %v103
    %v242 = vpop.f32.mrb[0].mxu0
    %v243 = vadd.f32 %v60, %v242
    %v244 = vpop.f32.mrb[0].mxu0
    %245 = vmatprep.mubr.f32.mxu0 0.0
    %246 = vmatmul.mubr.f32.gmra.mrb[0].mxu0 %v106
    %v247 = vpop.f32.mrb[0].mxu0
    %v248 = vadd.f32 %v60, %v247
    %v249 = vpop.f32.mrb[0].mxu0
    %250 = vmatprep.mubr.f32.mxu0 0.0
    %251 = vmatmul.mubr.f32.gmra.mrb[0].mxu0 %v109
    %v252 = vpop.f32.mrb[0].mxu0
    %v253 = vadd.f32 %v60, %v252
    %v254 = vpop.f32.mrb[0].mxu0
    %255 = vdwg.mxu0
    %v256 = vmax.f32 %v178, 0.0
    %v257 = vmax.f32 %v183, 0.0
    %v258 = vmax.f32 %v188, 0.0
    %v259 = vmax.f32 %v193, 0.0
    %v260 = vmax.f32 %v198, 0.0
    %v261 = vmax.f32 %v203, 0.0
    %v262 = vmax.f32 %v208, 0.0
    %v263 = vmax.f32 %v213, 0.0
    %v264 = vmax.f32 %v218, 0.0
    %v265 = vmax.f32 %v223, 0.0
    %v266 = vmax.f32 %v228, 0.0
    %v267 = vmax.f32 %v233, 0.0
    %v268 = vmax.f32 %v238, 0.0
    %v269 = vmax.f32 %v243, 0.0
    %v270 = vmax.f32 %v248, 0.0
    %v271 = vmax.f32 %v253, 0.0
    %v272 = vld [vmem:[%s5] sm:$0xff]
    %v273 = vld [vmem:[%s5 + $0x8] sm:$0xff]
    %v274 = vld [vmem:[%s5 + $0x10] sm:$0xff]
    %v275 = vld [vmem:[%s5 + $0x18] sm:$0xff]
    %v276 = vld [vmem:[%s5 + $0x20] sm:$0xff]
    %v277 = vld [vmem:[%s5 + $0x28] sm:$0xff]
    %v278 = vld [vmem:[%s5 + $0x30] sm:$0xff]
    %v279 = vld [vmem:[%s5 + $0x38] sm:$0xff]
    %v280 = vld [vmem:[%s6] sm:$0x1]
    %v282 = vlaneseq
    %v283 = vshrl.u32 %v282, 7
    %v284 = vsub.s32 0, %v283
    %v285 = vrot.slane %v280, %v284
    %vm287 = vcmask 523264
    %v289 = vsel %vm287, %v256, 0
    %v292 = vsel %vm287, %v257, 0
    %v295 = vsel %vm287, %v258, 0
    %v298 = vsel %vm287, %v259, 0
    %v301 = vsel %vm287, %v260, 0
    %v304 = vsel %vm287, %v261, 0
    %v307 = vsel %vm287, %v262, 0
    %v310 = vsel %vm287, %v263, 0
    %v313 = vsel %vm287, %v264, 0
    %v316 = vsel %vm287, %v265, 0
    %v319 = vsel %vm287, %v266, 0
    %v322 = vsel %vm287, %v267, 0
    %v325 = vsel %vm287, %v268, 0
    %v328 = vsel %vm287, %v269, 0
    %v331 = vsel %vm287, %v270, 0
    %v334 = vsel %vm287, %v271, 0
    %336 = vmatprep.subr.mxu0 0.0
    %337 = vmatpush1.msra.mxu0 %v272
    %338 = vmatprep.subr.mxu0 0.0
    %339 = vmatpush1.msra.mxu0 %v273
    %340 = vmatprep.subr.mxu0 0.0
    %341 = vmatpush1.msra.mxu0 %v274
    %342 = vmatprep.subr.mxu0 0.0
    %343 = vmatpush1.msra.mxu0 %v275
    %344 = vmatprep.subr.mxu0 0.0
    %345 = vmatpush1.msra.mxu0 %v276
    %346 = vmatprep.subr.mxu0 0.0
    %347 = vmatpush1.msra.mxu0 %v277
    %348 = vmatprep.subr.mxu0 0.0
    %349 = vmatpush1.msra.mxu0 %v278
    %350 = vmatprep.subr.mxu0 0.0
    %351 = vmatpush1.msra.mxu0 %v279
    %352 = vmatprep.subr.mxu0 0.0
    %353 = vmatpush1.msra.mxu0 0.0
    %354 = vmatprep.subr.mxu0 0.0
    %355 = vmatpush1.msra.mxu0 0.0
    %356 = vmatprep.subr.mxu0 0.0
    %357 = vmatpush1.msra.mxu0 0.0
    %358 = vmatprep.subr.mxu0 0.0
    %359 = vmatpush1.msra.mxu0 0.0
    %360 = vmatprep.subr.mxu0 0.0
    %361 = vmatpush1.msra.mxu0 0.0
    %362 = vmatprep.subr.mxu0 0.0
    %363 = vmatpush1.msra.mxu0 0.0
    %364 = vmatprep.subr.mxu0 0.0
    %365 = vmatpush1.msra.mxu0 0.0
    %366 = vmatprep.subr.mxu0 0.0
    %367 = vmatpush1.msra.mxu0 0.0
    %368 = vmatprep.subr.mxu0 0.0
    %369 = vmatpush1.msra.mxu0 0.0
    %370 = vmatprep.subr.mxu0 0.0
    %371 = vmatpush1.msra.mxu0 0.0
    %372 = vmatprep.subr.mxu0 0.0
    %373 = vmatpush1.msra.mxu0 0.0
    %374 = vmatprep.subr.mxu0 0.0
    %375 = vmatpush1.msra.mxu0 0.0
    %376 = vmatprep.subr.mxu0 0.0
    %377 = vmatpush1.msra.mxu0 0.0
    %378 = vmatprep.subr.mxu0 0.0
    %379 = vmatpush1.msra.mxu0 0.0
    %380 = vmatprep.subr.mxu0 0.0
    %381 = vmatpush1.msra.mxu0 0.0
    %382 = vmatprep.subr.mxu0 0.0
    %383 = vmatpush1.msra.mxu0 0.0
    %384 = vmatprep.subr.mxu0 0.0
    %385 = vmatpush1.msra.mxu0 0.0
    %386 = vmatprep.subr.mxu0 0.0
    %387 = vmatpush1.msra.mxu0 0.0
    %388 = vmatprep.subr.mxu0 0.0
    %389 = vmatpush1.msra.mxu0 0.0
    %390 = vmatprep.subr.mxu0 0.0
    %391 = vmatpush1.msra.mxu0 0.0
    %392 = vmatprep.subr.mxu0 0.0
    %393 = vmatpush1.msra.mxu0 0.0
    %394 = vmatprep.subr.mxu0 0.0
    %395 = vmatpush1.msra.mxu0 0.0
    %396 = vmatprep.subr.mxu0 0.0
    %397 = vmatpush1.msra.mxu0 0.0
    %398 = vmatprep.subr.mxu0 0.0
    %399 = vmatpush1.msra.mxu0 0.0
    %400 = vmatprep.mubr.f32.mxu0 0.0
    %401 = vmatmul.mubr.f32.gmra.mrb[0].mxu0 %v289
    %v402 = vpop.f32.mrb[0].mxu0
    %v403 = vadd.f32 %v285, %v402
    %v404 = vpop.f32.mrb[0].mxu0
    %405 = vmatprep.mubr.f32.mxu0 0.0
    %406 = vmatmul.mubr.f32.gmra.mrb[0].mxu0 %v292
    %v407 = vpop.f32.mrb[0].mxu0
    %v408 = vadd.f32 %v285, %v407
    %v409 = vpop.f32.mrb[0].mxu0
    %410 = vmatprep.mubr.f32.mxu0 0.0
    %411 = vmatmul.mubr.f32.gmra.mrb[0].mxu0 %v295
    %v412 = vpop.f32.mrb[0].mxu0
    %v413 = vadd.f32 %v285, %v412
    %v414 = vpop.f32.mrb[0].mxu0
    %415 = vmatprep.mubr.f32.mxu0 0.0
    %416 = vmatmul.mubr.f32.gmra.mrb[0].mxu0 %v298
    %v417 = vpop.f32.mrb[0].mxu0
    %v418 = vadd.f32 %v285, %v417
    %v419 = vpop.f32.mrb[0].mxu0
    %420 = vmatprep.mubr.f32.mxu0 0.0
    %421 = vmatmul.mubr.f32.gmra.mrb[0].mxu0 %v301
    %v422 = vpop.f32.mrb[0].mxu0
    %v423 = vadd.f32 %v285, %v422
    %v424 = vpop.f32.mrb[0].mxu0
    %425 = vmatprep.mubr.f32.mxu0 0.0
    %426 = vmatmul.mubr.f32.gmra.mrb[0].mxu0 %v304
    %v427 = vpop.f32.mrb[0].mxu0
    %v428 = vadd.f32 %v285, %v427
    %v429 = vpop.f32.mrb[0].mxu0
    %430 = vmatprep.mubr.f32.mxu0 0.0
    %431 = vmatmul.mubr.f32.gmra.mrb[0].mxu0 %v307
    %v432 = vpop.f32.mrb[0].mxu0
    %v433 = vadd.f32 %v285, %v432
    %v434 = vpop.f32.mrb[0].mxu0
    %435 = vmatprep.mubr.f32.mxu0 0.0
    %436 = vmatmul.mubr.f32.gmra.mrb[0].mxu0 %v310
    %v437 = vpop.f32.mrb[0].mxu0
    %v438 = vadd.f32 %v285, %v437
    %v439 = vpop.f32.mrb[0].mxu0
    %440 = vmatprep.mubr.f32.mxu0 0.0
    %441 = vmatmul.mubr.f32.gmra.mrb[0].mxu0 %v313
    %v442 = vpop.f32.mrb[0].mxu0
    %v443 = vadd.f32 %v285, %v442
    %v444 = vpop.f32.mrb[0].mxu0
    %445 = vmatprep.mubr.f32.mxu0 0.0
    %446 = vmatmul.mubr.f32.gmra.mrb[0].mxu0 %v316
    %v447 = vpop.f32.mrb[0].mxu0
    %v448 = vadd.f32 %v285, %v447
    %v449 = vpop.f32.mrb[0].mxu0
    %450 = vmatprep.mubr.f32.mxu0 0.0
    %451 = vmatmul.mubr.f32.gmra.mrb[0].mxu0 %v319
    %v452 = vpop.f32.mrb[0].mxu0
    %v453 = vadd.f32 %v285, %v452
    %v454 = vpop.f32.mrb[0].mxu0
    %455 = vmatprep.mubr.f32.mxu0 0.0
    %456 = vmatmul.mubr.f32.gmra.mrb[0].mxu0 %v322
    %v457 = vpop.f32.mrb[0].mxu0
    %v458 = vadd.f32 %v285, %v457
    %v459 = vpop.f32.mrb[0].mxu0
    %460 = vmatprep.mubr.f32.mxu0 0.0
    %461 = vmatmul.mubr.f32.gmra.mrb[0].mxu0 %v325
    %v462 = vpop.f32.mrb[0].mxu0
    %v463 = vadd.f32 %v285, %v462
    %v464 = vpop.f32.mrb[0].mxu0
    %465 = vmatprep.mubr.f32.mxu0 0.0
    %466 = vmatmul.mubr.f32.gmra.mrb[0].mxu0 %v328
    %v467 = vpop.f32.mrb[0].mxu0
    %v468 = vadd.f32 %v285, %v467
    %v469 = vpop.f32.mrb[0].mxu0
    %470 = vmatprep.mubr.f32.mxu0 0.0
    %471 = vmatmul.mubr.f32.gmra.mrb[0].mxu0 %v331
    %v472 = vpop.f32.mrb[0].mxu0
    %v473 = vadd.f32 %v285, %v472
    %v474 = vpop.f32.mrb[0].mxu0
    %475 = vmatprep.mubr.f32.mxu0 0.0
    %476 = vmatmul.mubr.f32.gmra.mrb[0].mxu0 %v334
    %v477 = vpop.f32.mrb[0].mxu0
    %v478 = vadd.f32 %v285, %v477
    %v479 = vpop.f32.mrb[0].mxu0
    %480 = vdwg.mxu0
    %v481 = vmax.f32 %v403, 0.0
    %v482 = vmax.f32 %v408, 0.0
    %v483 = vmax.f32 %v413, 0.0
    %v484 = vmax.f32 %v418, 0.0
    %v485 = vmax.f32 %v423, 0.0
    %v486 = vmax.f32 %v428, 0.0
    %v487 = vmax.f32 %v433, 0.0
    %v488 = vmax.f32 %v438, 0.0
    %v489 = vmax.f32 %v443, 0.0
    %v490 = vmax.f32 %v448, 0.0
    %v491 = vmax.f32 %v453, 0.0
    %v492 = vmax.f32 %v458, 0.0
    %v493 = vmax.f32 %v463, 0.0
    %v494 = vmax.f32 %v468, 0.0
    %v495 = vmax.f32 %v473, 0.0
    %v496 = vmax.f32 %v478, 0.0
    %v497 = vld [vmem:[%s7] sm:$0x1]
    %v498 = vld [vmem:[#allocation2] sm:$0x1]
    %500 = vset.pattern.permute.xlu0 0
    %501 = vperm.xlu0 %500, %v498
    %v502 = vpop.permute.xlu0 %501
    %v504 = vlaneseq
    %v505 = vshrl.u32 %v504, 7
    %v506 = vsub.s32 0, %v505
    %v507 = vrot.slane %v502, %v506
    %v509 = vsel %vm287, %v497, 0
    %v512 = vsel %vm287, %v481, 0
    %v515 = vsel %vm287, %v482, 0
    %v518 = vsel %vm287, %v483, 0
    %v521 = vsel %vm287, %v484, 0
    %v524 = vsel %vm287, %v485, 0
    %v527 = vsel %vm287, %v486, 0
    %v530 = vsel %vm287, %v487, 0
    %v533 = vsel %vm287, %v488, 0
    %v536 = vsel %vm287, %v489, 0
    %v539 = vsel %vm287, %v490, 0
    %v542 = vsel %vm287, %v491, 0
    %v545 = vsel %vm287, %v492, 0
    %v548 = vsel %vm287, %v493, 0
    %v551 = vsel %vm287, %v494, 0
    %v554 = vsel %vm287, %v495, 0
    %v557 = vsel %vm287, %v496, 0
    %559 = vmatprep.subr.mxu0 0.0
    %560 = vmatpush1.xpose.msra.mxu0 %v512
    %561 = vmatprep.subr.mxu0 0.0
    %562 = vmatpush1.xpose.msra.mxu0 %v515
    %563 = vmatprep.subr.mxu0 0.0
    %564 = vmatpush1.xpose.msra.mxu0 %v518
    %565 = vmatprep.subr.mxu0 0.0
    %566 = vmatpush1.xpose.msra.mxu0 %v521
    %567 = vmatprep.subr.mxu0 0.0
    %568 = vmatpush1.xpose.msra.mxu0 %v524
    %569 = vmatprep.subr.mxu0 0.0
    %570 = vmatpush1.xpose.msra.mxu0 %v527
    %571 = vmatprep.subr.mxu0 0.0
    %572 = vmatpush1.xpose.msra.mxu0 %v530
    %573 = vmatprep.subr.mxu0 0.0
    %574 = vmatpush1.xpose.msra.mxu0 %v533
    %575 = vmatprep.subr.mxu0 0.0
    %576 = vmatpush1.xpose.msra.mxu0 %v536
    %577 = vmatprep.subr.mxu0 0.0
    %578 = vmatpush1.xpose.msra.mxu0 %v539
    %579 = vmatprep.subr.mxu0 0.0
    %580 = vmatpush1.xpose.msra.mxu0 %v542
    %581 = vmatprep.subr.mxu0 0.0
    %582 = vmatpush1.xpose.msra.mxu0 %v545
    %583 = vmatprep.subr.mxu0 0.0
    %584 = vmatpush1.xpose.msra.mxu0 %v548
    %585 = vmatprep.subr.mxu0 0.0
    %586 = vmatpush1.xpose.msra.mxu0 %v551
    %587 = vmatprep.subr.mxu0 0.0
    %588 = vmatpush1.xpose.msra.mxu0 %v554
    %589 = vmatprep.subr.mxu0 0.0
    %590 = vmatpush1.xpose.msra.mxu0 %v557
    %591 = vmatprep.subr.mxu0 0.0
    %592 = vmatpush1.xpose.msra.mxu0 0.0
    %593 = vmatprep.subr.mxu0 0.0
    %594 = vmatpush1.xpose.msra.mxu0 0.0
    %595 = vmatprep.subr.mxu0 0.0
    %596 = vmatpush1.xpose.msra.mxu0 0.0
    %597 = vmatprep.subr.mxu0 0.0
    %598 = vmatpush1.xpose.msra.mxu0 0.0
    %599 = vmatprep.subr.mxu0 0.0
    %600 = vmatpush1.xpose.msra.mxu0 0.0
    %601 = vmatprep.subr.mxu0 0.0
    %602 = vmatpush1.xpose.msra.mxu0 0.0
    %603 = vmatprep.subr.mxu0 0.0
    %604 = vmatpush1.xpose.msra.mxu0 0.0
    %605 = vmatprep.subr.mxu0 0.0
    %606 = vmatpush1.xpose.msra.mxu0 0.0
    %607 = vmatprep.subr.mxu0 0.0
    %608 = vmatpush1.xpose.msra.mxu0 0.0
    %609 = vmatprep.subr.mxu0 0.0
    %610 = vmatpush1.xpose.msra.mxu0 0.0
    %611 = vmatprep.subr.mxu0 0.0
    %612 = vmatpush1.xpose.msra.mxu0 0.0
    %613 = vmatprep.subr.mxu0 0.0
    %614 = vmatpush1.xpose.msra.mxu0 0.0
    %615 = vmatprep.subr.mxu0 0.0
    %616 = vmatpush1.xpose.msra.mxu0 0.0
    %617 = vmatprep.subr.mxu0 0.0
    %618 = vmatpush1.xpose.msra.mxu0 0.0
    %619 = vmatprep.subr.mxu0 0.0
    %620 = vmatpush1.xpose.msra.mxu0 0.0
    %621 = vmatprep.subr.mxu0 0.0
    %622 = vmatpush1.xpose.msra.mxu0 0.0
    %623 = vmatprep.mubr.f32.mxu0 0.0
    %624 = vmatmul.mubr.f32.gmra.mrb[0].mxu0 %v509
    %v625 = vpop.f32.mrb[0].mxu0
    %v626 = vadd.f32 %v507, %v625
    %v627 = vpop.f32.mrb[0].mxu0
    %628 = vdwg.mxu0
    %v629 = vtanh.pop %v626
    %v630 = vlaneseq
    %v631 = vshrl.u32 %v630, 7
    %v632 = vsub.s32 0, %v631
    %v633 = vrot.slane %v629, %v632
    %634 = vst [vmem:[#allocation3] sm:$0xff] %v633
    %s635 = smul.u32 0, 128
    %v636 = vlaneseq
    %v637 = vshrl.u32 %v636, 7
    %v638 = vadd.s32 %v637, 8
    %v639 = vadd.s32 %v637, 16
    %v640 = vadd.s32 %v637, 24
    %v641 = vadd.s32 %v637, 32
    %v642 = vadd.s32 %v637, 40
    %v643 = vadd.s32 %v637, 48
    %v644 = vadd.s32 %v637, 56
    %v645 = vadd.s32 %v637, 64
    %v646 = vadd.s32 %v637, 72
    %v647 = vadd.s32 %v637, 80
    %v648 = vadd.s32 %v637, 88
    %v649 = vadd.s32 %v637, 96
    %v650 = vadd.s32 %v637, 104
    %v651 = vadd.s32 %v637, 112
    %v652 = vadd.s32 %v637, 120
    %v653 = vstv %s635
    %v654 = vadd.s32 %v653, %v637
    %v655 = vadd.s32 %v653, %v638
    %v656 = vadd.s32 %v653, %v639
    %v657 = vadd.s32 %v653, %v640
    %v658 = vadd.s32 %v653, %v641
    %v659 = vadd.s32 %v653, %v642
    %v660 = vadd.s32 %v653, %v643
    %v661 = vadd.s32 %v653, %v644
    %v662 = vadd.s32 %v653, %v645
    %v663 = vadd.s32 %v653, %v646
    %v664 = vadd.s32 %v653, %v647
    %v665 = vadd.s32 %v653, %v648
    %v666 = vadd.s32 %v653, %v649
    %v667 = vadd.s32 %v653, %v650
    %v668 = vadd.s32 %v653, %v651
    %v669 = vadd.s32 %v653, %v652
    %v670 = vld [vmem:[%s1] sm:$0x1]
    %v671 = vlaneseq
    %v672 = vshrl.u32 %v671, 7
    %v673 = vsub.s32 0, %v672
    %v674 = vrot.slane %v670, %v673
    %vm675 = vcmp.ge.s32.totalorder %v654, %v674
    %vm676 = vcmp.ge.s32.totalorder %v655, %v674
    %vm677 = vcmp.ge.s32.totalorder %v656, %v674
    %vm678 = vcmp.ge.s32.totalorder %v657, %v674
    %vm679 = vcmp.ge.s32.totalorder %v658, %v674
    %vm680 = vcmp.ge.s32.totalorder %v659, %v674
    %vm681 = vcmp.ge.s32.totalorder %v660, %v674
    %vm682 = vcmp.ge.s32.totalorder %v661, %v674
    %vm683 = vcmp.ge.s32.totalorder %v662, %v674
    %vm684 = vcmp.ge.s32.totalorder %v663, %v674
    %vm685 = vcmp.ge.s32.totalorder %v664, %v674
    %vm686 = vcmp.ge.s32.totalorder %v665, %v674
    %vm687 = vcmp.ge.s32.totalorder %v666, %v674
    %vm688 = vcmp.ge.s32.totalorder %v667, %v674
    %vm689 = vcmp.ge.s32.totalorder %v668, %v674
    %vm690 = vcmp.ge.s32.totalorder %v669, %v674
    %v691 = vld [vmem:[%s2] sm:$0x1]
    %v692 = vlaneseq
    %v693 = vshrl.u32 %v692, 7
    %v694 = vsub.s32 0, %v693
    %v695 = vrot.slane %v691, %v694
    %vm696 = vcmp.lt.s32.totalorder %v654, %v695
    %vm697 = vcmp.lt.s32.totalorder %v655, %v695
    %vm698 = vcmp.lt.s32.totalorder %v656, %v695
    %vm699 = vcmp.lt.s32.totalorder %v657, %v695
    %vm700 = vcmp.lt.s32.totalorder %v658, %v695
    %vm701 = vcmp.lt.s32.totalorder %v659, %v695
    %vm702 = vcmp.lt.s32.totalorder %v660, %v695
    %vm703 = vcmp.lt.s32.totalorder %v661, %v695
    %vm704 = vcmp.lt.s32.totalorder %v662, %v695
    %vm705 = vcmp.lt.s32.totalorder %v663, %v695
    %vm706 = vcmp.lt.s32.totalorder %v664, %v695
    %vm707 = vcmp.lt.s32.totalorder %v665, %v695
    %vm708 = vcmp.lt.s32.totalorder %v666, %v695
    %vm709 = vcmp.lt.s32.totalorder %v667, %v695
    %vm710 = vcmp.lt.s32.totalorder %v668, %v695
    %vm711 = vcmp.lt.s32.totalorder %v669, %v695
    %vm712 = vmand %vm675, %vm696
    %vm713 = vmand %vm676, %vm697
    %vm714 = vmand %vm677, %vm698
    %vm715 = vmand %vm678, %vm699
    %vm716 = vmand %vm679, %vm700
    %vm717 = vmand %vm680, %vm701
    %vm718 = vmand %vm681, %vm702
    %vm719 = vmand %vm682, %vm703
    %vm720 = vmand %vm683, %vm704
    %vm721 = vmand %vm684, %vm705
    %vm722 = vmand %vm685, %vm706
    %vm723 = vmand %vm686, %vm707
    %vm724 = vmand %vm687, %vm708
    %vm725 = vmand %vm688, %vm709
    %vm726 = vmand %vm689, %vm710
    %vm727 = vmand %vm690, %vm711
    %v728 = vsel %vm712, 1, 0
    %v729 = vsel %vm713, 1, 0
    %v730 = vsel %vm714, 1, 0
    %v731 = vsel %vm715, 1, 0
    %v732 = vsel %vm716, 1, 0
    %v733 = vsel %vm717, 1, 0
    %v734 = vsel %vm718, 1, 0
    %v735 = vsel %vm719, 1, 0
    %v736 = vsel %vm720, 1, 0
    %v737 = vsel %vm721, 1, 0
    %v738 = vsel %vm722, 1, 0
    %v739 = vsel %vm723, 1, 0
    %v740 = vsel %vm724, 1, 0
    %v741 = vsel %vm725, 1, 0
    %v742 = vsel %vm726, 1, 0
    %v743 = vsel %vm727, 1, 0
    %v744 = vcvt.s32.f32 %v728
    %v745 = vcvt.s32.f32 %v729
    %v746 = vcvt.s32.f32 %v730
    %v747 = vcvt.s32.f32 %v731
    %v748 = vcvt.s32.f32 %v732
    %v749 = vcvt.s32.f32 %v733
    %v750 = vcvt.s32.f32 %v734
    %v751 = vcvt.s32.f32 %v735
    %v752 = vcvt.s32.f32 %v736
    %v753 = vcvt.s32.f32 %v737
    %v754 = vcvt.s32.f32 %v738
    %v755 = vcvt.s32.f32 %v739
    %v756 = vcvt.s32.f32 %v740
    %v757 = vcvt.s32.f32 %v741
    %v758 = vcvt.s32.f32 %v742
    %v759 = vcvt.s32.f32 %v743
    %760 = vmatprep.subr.mxu0 0.0
    %761 = vmatpush1.msra.mxu0 %v744
    %762 = vmatprep.subr.mxu0 0.0
    %763 = vmatpush1.msra.mxu0 %v745
    %764 = vmatprep.subr.mxu0 0.0
    %765 = vmatpush1.msra.mxu0 %v746
    %766 = vmatprep.subr.mxu0 0.0
    %767 = vmatpush1.msra.mxu0 %v747
    %768 = vmatprep.subr.mxu0 0.0
    %769 = vmatpush1.msra.mxu0 %v748
    %770 = vmatprep.subr.mxu0 0.0
    %771 = vmatpush1.msra.mxu0 %v749
    %772 = vmatprep.subr.mxu0 0.0
    %773 = vmatpush1.msra.mxu0 %v750
    %774 = vmatprep.subr.mxu0 0.0
    %775 = vmatpush1.msra.mxu0 %v751
    %776 = vmatprep.subr.mxu0 0.0
    %777 = vmatpush1.msra.mxu0 %v752
    %778 = vmatprep.subr.mxu0 0.0
    %779 = vmatpush1.msra.mxu0 %v753
    %780 = vmatprep.subr.mxu0 0.0
    %781 = vmatpush1.msra.mxu0 %v754
    %782 = vmatprep.subr.mxu0 0.0
    %783 = vmatpush1.msra.mxu0 %v755
    %784 = vmatprep.subr.mxu0 0.0
    %785 = vmatpush1.msra.mxu0 %v756
    %786 = vmatprep.subr.mxu0 0.0
    %787 = vmatpush1.msra.mxu0 %v757
    %788 = vmatprep.subr.mxu0 0.0
    %789 = vmatpush1.msra.mxu0 %v758
    %790 = vmatprep.subr.mxu0 0.0
    %791 = vmatpush1.msra.mxu0 %v759
    %792 = vmatprep.subr.mxu0 0.0
    %793 = vmatpush1.msra.mxu0 0.0
    %794 = vmatprep.subr.mxu0 0.0
    %795 = vmatpush1.msra.mxu0 0.0
    %796 = vmatprep.subr.mxu0 0.0
    %797 = vmatpush1.msra.mxu0 0.0
    %798 = vmatprep.subr.mxu0 0.0
    %799 = vmatpush1.msra.mxu0 0.0
    %800 = vmatprep.subr.mxu0 0.0
    %801 = vmatpush1.msra.mxu0 0.0
    %802 = vmatprep.subr.mxu0 0.0
    %803 = vmatpush1.msra.mxu0 0.0
    %804 = vmatprep.subr.mxu0 0.0
    %805 = vmatpush1.msra.mxu0 0.0
    %806 = vmatprep.subr.mxu0 0.0
    %807 = vmatpush1.msra.mxu0 0.0
    %808 = vmatprep.subr.mxu0 0.0
    %809 = vmatpush1.msra.mxu0 0.0
    %810 = vmatprep.subr.mxu0 0.0
    %811 = vmatpush1.msra.mxu0 0.0
    %812 = vmatprep.subr.mxu0 0.0
    %813 = vmatpush1.msra.mxu0 0.0
    %814 = vmatprep.subr.mxu0 0.0
    %815 = vmatpush1.msra.mxu0 0.0
    %816 = vmatprep.subr.mxu0 0.0
    %817 = vmatpush1.msra.mxu0 0.0
    %818 = vmatprep.subr.mxu0 0.0
    %819 = vmatpush1.msra.mxu0 0.0
    %820 = vmatprep.subr.mxu0 0.0
    %821 = vmatpush1.msra.mxu0 0.0
    %822 = vmatprep.subr.mxu0 0.0
    %823 = vmatpush1.msra.mxu0 0.0
    %824 = vmatprep.mubr.f32.mxu0 0.0
    %825 = vmatmul.mubr.f32.gmra.mrb[0].mxu0 %v629
    %v826 = vpop.f32.mrb[0].mxu0
    %v827 = vadd.f32 0.0, %v826
    %v828 = vpop.f32.mrb[0].mxu0
    %829 = vdwg.mxu0
    %v830 = vlaneseq
    %v831 = vshrl.u32 %v830, 7
    %v832 = vsub.s32 0, %v831
    %v833 = vrot.slane %v827, %v832
    %vm834 = vcmask 31744
    %835 = vst.msk [vmem:[%s10] sm:$0xff] %vm834, %v833
    // Predicated region
    $region38: #{tpu_custom_call.1} parent=1 // pred_check
      _
    $region39: #{tpu_custom_call.1} parent=1 // pred_check_branch
      %837 = sbr.rel (0) target = $region41
    $region40: #{tpu_custom_call.1} parent=1 // pred_region
      %s839 = ssub.s32 128, 128
      %840 = vsyncadd [#allocation4], %s839
      %s842 = sshll.u32 [#allocation3], 4
      %s843 = int_to_ptr.vmem [resolvable:$true] %s842
      %845 = dma.vmem_to_hbm [thread:$0]  %s843, 128, %s9, [#allocation4]
    $region41: #{tpu_custom_call.1} parent=1 // pred_fallthru
      _
    // Predicated region
    $region42: #{tpu_custom_call.1} parent=1 // pred_check
      _
    $region43: #{tpu_custom_call.1} parent=1 // pred_check_branch
      %847 = sbr.rel (0) target = $region45
    $region44: #{tpu_custom_call.1} parent=1 // pred_region
      _
    $region45: #{tpu_custom_call.1} parent=1 // pred_fallthru
      _
    // Predicated region
    $region46: #{tpu_custom_call.1} parent=1 // pred_check
      _
    $region47: #{tpu_custom_call.1} parent=1 // pred_check_branch
      %849 = sbr.rel (0) target = $region49
    $region48: #{tpu_custom_call.1} parent=1 // pred_region
      %850 = dma.done [#allocation4], 128
    $region49: #{tpu_custom_call.1} parent=1 // pred_fallthru
      _
    // Predicated region
    $region50: #{tpu_custom_call.1} parent=1 // pred_check
      _
    $region51: #{tpu_custom_call.1} parent=1 // pred_check_branch
      %852 = sbr.rel (0) target = $region53
    $region52: #{tpu_custom_call.1} parent=1 // pred_region
      _
    $region53: #{tpu_custom_call.1} parent=1 // pred_fallthru
      _
    %853 = vsyncpa [#allocation4], 1

</llo_original>
